<compile_context>
chip_gen: v5e
topology: v5e:2x2
jax: 0.10.0
libtpu: 0.0.40
codegen_flags: <defaults>
</compile_context>

<pallas_src>
import functools

import jax
import jax.numpy as jnp
from jax import lax
from jax.experimental import pallas as pl
from jax.experimental.pallas import tpu as pltpu

_LANES = 128
_MAX_TILE_ROWS = 1024   # (1024, 128) f32 tile = 512 KiB
_NUM_CORES = 2          # v7x: 2 TensorCores; harmless serial loop on v5e/v6e


def _round_up(x, m):
    return ((x + m - 1) // m) * m


def _nmse_kernel(pred_ref, tgt_ref, res_d_ref, res_t_ref, acc_d_ref, acc_t_ref,
                 *, valid_rows, tile_rows, need_mask):
    """Per-core accumulation of sum((o-t)^2) and sum(t^2).

    pred_ref, tgt_ref : (tile_rows, 128) VMEM input tiles (original dtype)
    res_d_ref         : (8, 128) VMEM partial sums of (o-t)^2 for this core
    res_t_ref         : (8, 128) VMEM partial sums of t^2     for this core
    acc_d_ref/acc_t_ref: (tile_rows, 128) f32 VMEM accumulators
    """
    c = pl.program_id(0)          # core half
    i = pl.program_id(1)          # reduction step within the half
    spc = pl.num_programs(1)      # steps per core

    @pl.when(i == 0)
    def _():
        acc_d_ref[...] = jnp.zeros_like(acc_d_ref)
        acc_t_ref[...] = jnp.zeros_like(acc_t_ref)

    o = pred_ref[...].astype(jnp.float32)
    t = tgt_ref[...].astype(jnp.float32)

    if need_mask:
        # Mask rows at/after the true row count (ragged last tile and any
        # clamped over-covering steps contribute exactly zero).
        row0 = (c * spc + i) * tile_rows
        row_idx = row0 + lax.broadcasted_iota(jnp.int32, o.shape, 0)
        valid = row_idx < valid_rows
        t = jnp.where(valid, t, 0.0)
        d = jnp.where(valid, o - t, 0.0)
    else:
        d = o - t

    acc_d_ref[...] += d * d
    acc_t_ref[...] += t * t

    @pl.when(i == spc - 1)
    def _():
        # Single reduction per core: (tile_rows,128) -> (8,128) vreg-wise partials.
        res_d_ref[...] = acc_d_ref[...].reshape(tile_rows // 8, 8, _LANES).sum(axis=0)
        res_t_ref[...] = acc_t_ref[...].reshape(tile_rows // 8, 8, _LANES).sum(axis=0)


def nmse_loss(output, target):
    """Pallas TPU implementation of NMSELoss.forward(output, target)."""
    assert output.shape == target.shape, "output/target shape mismatch"
    n = int(output.size)
    assert n > 0

    x = output.reshape(-1)
    y = target.reshape(-1)

    lane_pad = (-n) % _LANES
    if lane_pad:
        # Rare path: numel not a multiple of 128. Zero pad contributes 0 to both
        # sums; means below still divide by the true n.
        x = jnp.pad(x, (0, lane_pad))
        y = jnp.pad(y, (0, lane_pad))

    rows = (n + lane_pad) // _LANES
    x2 = x.reshape(rows, _LANES)
    y2 = y.reshape(rows, _LANES)

    tile_rows = min(_MAX_TILE_ROWS, _round_up(rows, 32))
    num_tiles = -(-rows // tile_rows)                  # ceil
    steps_per_core = -(-num_tiles // _NUM_CORES)       # ceil
    # Masking is only needed if the grid over-covers the valid row range.
    need_mask = (_NUM_CORES * steps_per_core * tile_rows) != rows

    def in_map(c, i):
        # Clamp so over-covering trailing steps re-read the last valid tile
        # (their contribution is fully masked out inside the kernel).
        return (jnp.minimum(c * steps_per_core + i, num_tiles - 1), 0)

    kernel = functools.partial(
        _nmse_kernel,
        valid_rows=rows,
        tile_rows=tile_rows,
        need_mask=need_mask,
    )

    res_d, res_t = pl.pallas_call(
        kernel,
        out_shape=(
            jax.ShapeDtypeStruct((_NUM_CORES, 8, _LANES), jnp.float32),
            jax.ShapeDtypeStruct((_NUM_CORES, 8, _LANES), jnp.float32),
        ),
        grid_spec=pltpu.PrefetchScalarGridSpec(
            num_scalar_prefetch=0,
            grid=(_NUM_CORES, steps_per_core),
            in_specs=[
                pl.BlockSpec((tile_rows, _LANES), in_map),
                pl.BlockSpec((tile_rows, _LANES), in_map),
            ],
            out_specs=[
                pl.BlockSpec((None, 8, _LANES), lambda c, i: (c, 0, 0)),
                pl.BlockSpec((None, 8, _LANES), lambda c, i: (c, 0, 0)),
            ],
            scratch_shapes=[
                pltpu.VMEM((tile_rows, _LANES), jnp.float32),
                pltpu.VMEM((tile_rows, _LANES), jnp.float32),
            ],
        ),
        compiler_params=pltpu.CompilerParams(
            dimension_semantics=("parallel", "arbitrary"),
        ),
    )(x2, y2)

    # Tiny cross-core combine + epsilon in the wrapper (matches PyTorch semantics).
    inv_n = 1.0 / n
    mse = jnp.sum(res_d) * inv_n
    norm = jnp.sum(res_t) * inv_n
    return mse / (norm + 1e-6)


def nmse_ref(output, target):
    """Pure-JAX reference matching the PyTorch module."""
    output = output.astype(jnp.float32)
    target = target.astype(jnp.float32)
    mse = jnp.mean((output - target) ** 2)
    norm = jnp.mean(target ** 2)
    return mse / (norm + 1e-6)


if __name__ == "__main__":
    key = jax.random.PRNGKey(0)
    k1, k2, k3, k4 = jax.random.split(key, 4)

    loss_fn = jax.jit(nmse_loss)

    # Small NCHW prediction/target pair (numel % 128 == 0 -> no pad path).
    out1 = jax.random.normal(k1, (2, 4, 16, 16), dtype=jnp.float32)
    tgt1 = jax.random.normal(k2, (2, 4, 16, 16), dtype=jnp.float32)
    loss1 = jax.block_until_ready(loss_fn(out1, tgt1))
    ref1 = nmse_ref(out1, tgt1)
    assert jnp.allclose(loss1, ref1, rtol=1e-5, atol=1e-6), (loss1, ref1)

    # Ragged numel (not a multiple of 128) exercises the pad + in-kernel mask path.
    out2 = jax.random.normal(k3, (3, 5, 7, 9), dtype=jnp.float32)
    tgt2 = jax.random.normal(k4, (3, 5, 7, 9), dtype=jnp.float32)
    loss2 = jax.block_until_ready(loss_fn(out2, tgt2))
    ref2 = nmse_ref(out2, tgt2)
    assert jnp.allclose(loss2, ref2, rtol=1e-5, atol=1e-6), (loss2, ref2)

    print("KERNEL_OK")
</pallas_src>

<mosaic_0001>
module attributes {stable_mosaic.version = 11 : i64} {
  func.func @_nmse_kernel(%arg0: i32, %arg1: i32, %arg2: memref<32x128xf32, #tpu.memory_space<vmem>>, %arg3: memref<32x128xf32, #tpu.memory_space<vmem>>, %arg4: memref<1x8x128xf32, #tpu.memory_space<vmem>>, %arg5: memref<1x8x128xf32, #tpu.memory_space<vmem>>, %arg6: memref<32x128xf32, #tpu.memory_space<vmem>>, %arg7: memref<32x128xf32, #tpu.memory_space<vmem>>) attributes {dimension_semantics = [#tpu.dimension_semantics<parallel>, #tpu.dimension_semantics<arbitrary>], iteration_bounds = array<i64: 2, 1>, scalar_prefetch = 0 : i64, scratch_operands = 2 : i64, tpu.core_type = #tpu.core_type<tc>, window_params = [{transform_indices = @transform_0, window_bounds = array<i64: 32, 128>}, {transform_indices = @transform_1, window_bounds = array<i64: 32, 128>}, {transform_indices = @transform_2, window_bounds = array<i64: 1, 8, 128>}, {transform_indices = @transform_3, window_bounds = array<i64: 1, 8, 128>}]} {
    %c0_i32 = arith.constant 0 : i32
    %0 = arith.cmpi eq, %arg1, %c0_i32 : i32
    %1 = arith.extui %0 : i1 to i32
    %c0_i32_0 = arith.constant 0 : i32
    %2 = arith.cmpi ne, %1, %c0_i32_0 : i32
    scf.if %2 {
      %cst_15 = arith.constant 0.000000e+00 : f32
      %29 = vector.broadcast %cst_15 : f32 to vector<32x128xf32>
      %c0_16 = arith.constant 0 : index
      %c0_17 = arith.constant 0 : index
      %30 = vector.load %arg6[%c0_16, %c0_17] : memref<32x128xf32, #tpu.memory_space<vmem>>, vector<32x128xf32>
      tpu.vector_store %arg6[%c0_16, %c0_17], %29 {strides = array<i32>} : memref<32x128xf32, #tpu.memory_space<vmem>>, vector<32x128xf32>,
      %cst_18 = arith.constant 0.000000e+00 : f32
      %31 = vector.broadcast %cst_18 : f32 to vector<32x128xf32>
      %c0_19 = arith.constant 0 : index
      %c0_20 = arith.constant 0 : index
      %32 = vector.load %arg7[%c0_19, %c0_20] : memref<32x128xf32, #tpu.memory_space<vmem>>, vector<32x128xf32>
      tpu.vector_store %arg7[%c0_19, %c0_20], %31 {strides = array<i32>} : memref<32x128xf32, #tpu.memory_space<vmem>>, vector<32x128xf32>,
    } else {
    }
    %c0 = arith.constant 0 : index
    %c0_1 = arith.constant 0 : index
    %3 = vector.load %arg2[%c0, %c0_1] : memref<32x128xf32, #tpu.memory_space<vmem>>, vector<32x128xf32>
    %c0_2 = arith.constant 0 : index
    %c0_3 = arith.constant 0 : index
    %4 = vector.load %arg3[%c0_2, %c0_3] : memref<32x128xf32, #tpu.memory_space<vmem>>, vector<32x128xf32>
    %c1_i32 = arith.constant 1 : i32
    %5 = arith.muli %arg0, %c1_i32 : i32
    %6 = arith.addi %5, %arg1 : i32
    %c32_i32 = arith.constant 32 : i32
    %7 = arith.muli %6, %c32_i32 : i32
    %8 = tpu.iota {dimensions = array<i32: 0>} : vector<32x128xi32>
    %9 = vector.broadcast %7 : i32 to vector<32x128xi32>
    %10 = arith.addi %9, %8 : vector<32x128xi32>
    %c16_i32 = arith.constant 16 : i32
    %11 = vector.broadcast %c16_i32 : i32 to vector<32x128xi32>
    %12 = arith.cmpi slt, %10, %11 : vector<32x128xi32>
    %cst = arith.constant 0.000000e+00 : f32
    %13 = vector.broadcast %cst : f32 to vector<32x128xf32>
    %14 = arith.select %12, %4, %13 : vector<32x128xi1>, vector<32x128xf32>
    %15 = arith.subf %3, %14 : vector<32x128xf32>
    %cst_4 = arith.constant 0.000000e+00 : f32
    %16 = vector.broadcast %cst_4 : f32 to vector<32x128xf32>
    %17 = arith.select %12, %15, %16 : vector<32x128xi1>, vector<32x128xf32>
    %c0_5 = arith.constant 0 : index
    %c0_6 = arith.constant 0 : index
    %18 = vector.load %arg6[%c0_5, %c0_6] : memref<32x128xf32, #tpu.memory_space<vmem>>, vector<32x128xf32>
    %19 = arith.mulf %17, %17 : vector<32x128xf32>
    %20 = arith.addf %18, %19 : vector<32x128xf32>
    %c0_7 = arith.constant 0 : index
    %c0_8 = arith.constant 0 : index
    %21 = vector.load %arg6[%c0_7, %c0_8] : memref<32x128xf32, #tpu.memory_space<vmem>>, vector<32x128xf32>
    tpu.vector_store %arg6[%c0_7, %c0_8], %20 {strides = array<i32>} : memref<32x128xf32, #tpu.memory_space<vmem>>, vector<32x128xf32>,
    %c0_9 = arith.constant 0 : index
    %c0_10 = arith.constant 0 : index
    %22 = vector.load %arg7[%c0_9, %c0_10] : memref<32x128xf32, #tpu.memory_space<vmem>>, vector<32x128xf32>
    %23 = arith.mulf %14, %14 : vector<32x128xf32>
    %24 = arith.addf %22, %23 : vector<32x128xf32>
    %c0_11 = arith.constant 0 : index
    %c0_12 = arith.constant 0 : index
    %25 = vector.load %arg7[%c0_11, %c0_12] : memref<32x128xf32, #tpu.memory_space<vmem>>, vector<32x128xf32>
    tpu.vector_store %arg7[%c0_11, %c0_12], %24 {strides = array<i32>} : memref<32x128xf32, #tpu.memory_space<vmem>>, vector<32x128xf32>,
    %c0_i32_13 = arith.constant 0 : i32
    %26 = arith.cmpi eq, %arg1, %c0_i32_13 : i32
    %27 = arith.extui %26 : i1 to i32
    %c0_i32_14 = arith.constant 0 : i32
    %28 = arith.cmpi ne, %27, %c0_i32_14 : i32
    scf.if %28 {
      %c0_15 = arith.constant 0 : index
      %c0_16 = arith.constant 0 : index
      %29 = vector.load %arg6[%c0_15, %c0_16] : memref<32x128xf32, #tpu.memory_space<vmem>>, vector<32x128xf32>
      %30 = vector.shape_cast %29 : vector<32x128xf32> to vector<4x8x128xf32>
      %cst_17 = arith.constant dense<0.000000e+00> : vector<8x128xf32>
      %31 = vector.multi_reduction <add>, %30, %cst_17 [0] : vector<4x8x128xf32> to vector<8x128xf32>
      %c0_18 = arith.constant 0 : index
      %c0_19 = arith.constant 0 : index
      %c0_20 = arith.constant 0 : index
      %32 = vector.load %arg4[%c0_18, %c0_19, %c0_20] : memref<1x8x128xf32, #tpu.memory_space<vmem>>, vector<1x8x128xf32>
      %33 = vector.shape_cast %32 : vector<1x8x128xf32> to vector<8x128xf32>
      %34 = vector.shape_cast %31 : vector<8x128xf32> to vector<1x8x128xf32>
      tpu.vector_store %arg4[%c0_18, %c0_19, %c0_20], %34 {strides = array<i32>} : memref<1x8x128xf32, #tpu.memory_space<vmem>>, vector<1x8x128xf32>,
      %c0_21 = arith.constant 0 : index
      %c0_22 = arith.constant 0 : index
      %35 = vector.load %arg7[%c0_21, %c0_22] : memref<32x128xf32, #tpu.memory_space<vmem>>, vector<32x128xf32>
      %36 = vector.shape_cast %35 : vector<32x128xf32> to vector<4x8x128xf32>
      %cst_23 = arith.constant dense<0.000000e+00> : vector<8x128xf32>
      %37 = vector.multi_reduction <add>, %36, %cst_23 [0] : vector<4x8x128xf32> to vector<8x128xf32>
      %c0_24 = arith.constant 0 : index
      %c0_25 = arith.constant 0 : index
      %c0_26 = arith.constant 0 : index
      %38 = vector.load %arg5[%c0_24, %c0_25, %c0_26] : memref<1x8x128xf32, #tpu.memory_space<vmem>>, vector<1x8x128xf32>
      %39 = vector.shape_cast %38 : vector<1x8x128xf32> to vector<8x128xf32>
      %40 = vector.shape_cast %37 : vector<8x128xf32> to vector<1x8x128xf32>
      tpu.vector_store %arg5[%c0_24, %c0_25, %c0_26], %40 {strides = array<i32>} : memref<1x8x128xf32, #tpu.memory_space<vmem>>, vector<1x8x128xf32>,
    } else {
    }
    return
  }
  func.func @transform_0(%arg0: i32, %arg1: i32) -> (i32, i32) {
    %c1_i32 = arith.constant 1 : i32
    %0 = arith.muli %arg0, %c1_i32 : i32
    %1 = arith.addi %0, %arg1 : i32
    %c0_i32 = arith.constant 0 : i32
    %2 = arith.minsi %1, %c0_i32 : i32
    %c0_i32_0 = arith.constant 0 : i32
    %c0_i32_1 = arith.constant 0 : i32
    return %2, %c0_i32_0 : i32, i32
  }
  func.func @transform_1(%arg0: i32, %arg1: i32) -> (i32, i32) {
    %c1_i32 = arith.constant 1 : i32
    %0 = arith.muli %arg0, %c1_i32 : i32
    %1 = arith.addi %0, %arg1 : i32
    %c0_i32 = arith.constant 0 : i32
    %2 = arith.minsi %1, %c0_i32 : i32
    %c0_i32_0 = arith.constant 0 : i32
    %c0_i32_1 = arith.constant 0 : i32
    return %2, %c0_i32_0 : i32, i32
  }
  func.func @transform_2(%arg0: i32, %arg1: i32) -> (i32, i32, i32) {
    %c0_i32 = arith.constant 0 : i32
    %c0_i32_0 = arith.constant 0 : i32
    %c0_i32_1 = arith.constant 0 : i32
    return %arg0, %c0_i32, %c0_i32_0 : i32, i32, i32
  }
  func.func @transform_3(%arg0: i32, %arg1: i32) -> (i32, i32, i32) {
    %c0_i32 = arith.constant 0 : i32
    %c0_i32_0 = arith.constant 0 : i32
    %c0_i32_1 = arith.constant 0 : i32
    return %arg0, %c0_i32, %c0_i32_0 : i32, i32, i32
  }
}

</mosaic_0001>

<llo_original>
// kernel: nmse_loss.1
$region0: #{nmse_loss.1}
  #allocation0 [shape = 'u32[]', space=smem, size = 0x4, offset = 0x4, fixed_abs, tag = 'smem constant byte address 0x4 - core index']
  #allocation1 [shape = 'u32[72,128]{1,0:T(1,128)}', space=vmem, size = 0x9000, scoped, tag = 'internal scratch']
  #allocation2 [shape = 'f32[32,128]{1,0:T(8,128)}', space=vmem, size = 0x4000, scoped, tag = 'scratch operand']
  #allocation3 [shape = 'f32[32,128]{1,0:T(8,128)}', space=vmem, size = 0x4000, scoped, tag = 'scratch operand']
  %s0 = inlined_call_operand.vmem [shape: f32[16,128], index: 0, kind: input, shape index: {}]
  %s1 = inlined_call_operand.vmem [shape: f32[16,128], index: 1, kind: input, shape index: {}]
  %s2 = inlined_call_operand.vmem [shape: f32[2,8,128], index: 2, kind: output, shape index: {0}]
  %s3 = inlined_call_operand.vmem [shape: f32[2,8,128], index: 3, kind: output, shape index: {1}]
  %4 = xla_tuple %s2, %s3
  %s5 = sld [smem:[#allocation0]]
  $region57: #{nmse_loss.1} parent=0
    _
  %s7 = ssub.s32 1, %s5
  %s8 = scalar_select 0, %s7, %s5
  loop: start=0, step=1, limit=4
  $region2: #{nmse_loss.1} parent=0 // loop_pre_header
    _
  $region3: #{nmse_loss.1} parent=0 // loop_header
    %s10 = sphi 0, %s14
    %p11 = scmp.ge.s32.totalorder %s10, 4
    %s17 = sphi 0, %s29
    %s18 = sphi 0, %s25
    %s19 = sphi 0, %s17
    %s20 = sphi 0, %s18
    %s21 = sphi 0, %s19
    %s22 = sphi 0, %s20
    %s38 = sphi 0, %s40
    %s41 = sphi 0, %s38
    %s42 = sphi 0, %s41
    %s58 = sphi 0, %s42
    %s70 = sphi 0, %s72
    %s73 = sphi 0, %s70
    %s74 = sphi 0, %s73
    %s90 = sphi 0, %s74
    %s96 = sphi 0, %s98
    %s99 = sphi 0, %s96
    %s100 = sphi 0, %s99
    %s116 = sphi 0, %s100
    %s122 = sphi 0, %s124
    %s125 = sphi 0, %s122
    %s126 = sphi 0, %s125
    %s142 = sphi 0, %s126
  $region4: #{nmse_loss.1} parent=0 // loop_header_branch
    %13 = sbr.rel (%p11) target = $region8
  $region5: #{nmse_loss.1} parent=0 // loop_body
    %s15 = ssub.s32 %s10, 1
    %s16 = ssub.s32 %s10, 2
    %s23 = sadd.s32 1, %s18
    %p24 = scmp.ge.s32.totalorder %s23, 1
    %s25 = scalar_select %p24, 0, %s23
    %s26 = sadd.s32 1, %s17
    %s27 = scalar_select %p24, %s26, %s17
    %p28 = scmp.ge.s32.totalorder %s27, 2
    %s29 = scalar_select %p28, 0, %s27
    %s30 = sadd.s32 %s17, %s18
    %p31 = scmp.lt.s32.totalorder %s30, 0
    %s32 = scalar_select %p31, %s30, 0
    %s33 = sadd.s32 %s29, %s25
    %p34 = scmp.lt.s32.totalorder %s33, 0
    %s35 = scalar_select %p34, %s33, 0
    %s36 = ssub.s32 %s32, %s35
    %p37 = scmp.eq.s32.totalorder %s36, 0
    %s39 = sadd.s32 %s38, 1
    %s40 = scalar_select %p37, %s38, %s39
    %p43 = pneg %p37
    %p44 = scmp.eq.s32.totalorder %s10, 1
    %p45 = por %p43, %p44
    %p46 = scmp.ne.s32.totalorder %s38, %s41
    %p47 = scmp.eq.s32.totalorder %s10, 0
    %p48 = por %p46, %p47
    %p49 = scmp.ne.s32.totalorder %s38, %s41
    %p50 = scmp.eq.s32.totalorder %s15, 1
    %p51 = por %p49, %p50
    %p52 = scmp.ne.s32.totalorder %s41, %s42
    %p53 = scmp.eq.s32.totalorder %s15, 0
    %p54 = por %p52, %p53
    %p55 = scmp.ne.s32.totalorder %s41, %s42
    %p56 = scmp.eq.s32.totalorder %s16, 1
    %p57 = por %p55, %p56
    %p59 = scmp.ne.s32.totalorder %s42, %s58
    %p60 = scmp.eq.s32.totalorder %s16, 0
    %p61 = por %p59, %p60
    %s62 = sadd.s32 %s17, %s18
    %p63 = scmp.lt.s32.totalorder %s62, 0
    %s64 = scalar_select %p63, %s62, 0
    %s65 = sadd.s32 %s29, %s25
    %p66 = scmp.lt.s32.totalorder %s65, 0
    %s67 = scalar_select %p66, %s65, 0
    %s68 = ssub.s32 %s64, %s67
    %p69 = scmp.eq.s32.totalorder %s68, 0
    %s71 = sadd.s32 %s70, 1
    %s72 = scalar_select %p69, %s70, %s71
    %p75 = pneg %p69
    %p76 = scmp.eq.s32.totalorder %s10, 1
    %p77 = por %p75, %p76
    %p78 = scmp.ne.s32.totalorder %s70, %s73
    %p79 = scmp.eq.s32.totalorder %s10, 0
    %p80 = por %p78, %p79
    %p81 = scmp.ne.s32.totalorder %s70, %s73
    %p82 = scmp.eq.s32.totalorder %s15, 1
    %p83 = por %p81, %p82
    %p84 = scmp.ne.s32.totalorder %s73, %s74
    %p85 = scmp.eq.s32.totalorder %s15, 0
    %p86 = por %p84, %p85
    %p87 = scmp.ne.s32.totalorder %s73, %s74
    %p88 = scmp.eq.s32.totalorder %s16, 1
    %p89 = por %p87, %p88
    %p91 = scmp.ne.s32.totalorder %s74, %s90
    %p92 = scmp.eq.s32.totalorder %s16, 0
    %p93 = por %p91, %p92
    %s94 = ssub.s32 %s17, %s29
    %p95 = scmp.eq.s32.totalorder %s94, 0
    %s97 = sadd.s32 %s96, 1
    %s98 = scalar_select %p95, %s96, %s97
    %p101 = pneg %p95
    %p102 = scmp.eq.s32.totalorder %s10, 1
    %p103 = por %p101, %p102
    %p104 = scmp.ne.s32.totalorder %s96, %s99
    %p105 = scmp.eq.s32.totalorder %s10, 0
    %p106 = por %p104, %p105
    %p107 = scmp.ne.s32.totalorder %s96, %s99
    %p108 = scmp.eq.s32.totalorder %s15, 1
    %p109 = por %p107, %p108
    %p110 = scmp.ne.s32.totalorder %s99, %s100
    %p111 = scmp.eq.s32.totalorder %s15, 0
    %p112 = por %p110, %p111
    %p113 = scmp.ne.s32.totalorder %s99, %s100
    %p114 = scmp.eq.s32.totalorder %s16, 1
    %p115 = por %p113, %p114
    %p117 = scmp.ne.s32.totalorder %s100, %s116
    %p118 = scmp.eq.s32.totalorder %s16, 0
    %p119 = por %p117, %p118
    %s120 = ssub.s32 %s17, %s29
    %p121 = scmp.eq.s32.totalorder %s120, 0
    %s123 = sadd.s32 %s122, 1
    %s124 = scalar_select %p121, %s122, %s123
    %p127 = pneg %p121
    %p128 = scmp.eq.s32.totalorder %s10, 1
    %p129 = por %p127, %p128
    %p130 = scmp.ne.s32.totalorder %s122, %s125
    %p131 = scmp.eq.s32.totalorder %s10, 0
    %p132 = por %p130, %p131
    %p133 = scmp.ne.s32.totalorder %s122, %s125
    %p134 = scmp.eq.s32.totalorder %s15, 1
    %p135 = por %p133, %p134
    %p136 = scmp.ne.s32.totalorder %s125, %s126
    %p137 = scmp.eq.s32.totalorder %s15, 0
    %p138 = por %p136, %p137
    %p139 = scmp.ne.s32.totalorder %s125, %s126
    %p140 = scmp.eq.s32.totalorder %s16, 1
    %p141 = por %p139, %p140
    %p143 = scmp.ne.s32.totalorder %s126, %s142
    %p144 = scmp.eq.s32.totalorder %s16, 0
    %p145 = por %p143, %p144
    %p146 = scmp.le.s32.totalorder 1, %s10
    %p147 = scmp.lt.s32.totalorder %s10, 3
    %p148 = pnand %p146, %p147
    %p149 = pneg %p148
    // Predicated region
    $region9: #{nmse_loss.1} parent=5 // pred_check
      _
    $region10: #{nmse_loss.1} parent=5 // pred_check_branch
      %151 = sbr.rel (%p148) target = $region12
    $region11: #{nmse_loss.1} parent=5 // pred_region
      %s152 = ssub.s32 %s10, 1
    $region12: #{nmse_loss.1} parent=5 // pred_fallthru
      _
    %p153 = scmp.lt.s32.totalorder %s10, 2
    // Predicated region
    $region13: #{nmse_loss.1} parent=5 // pred_check
      %p154 = pneg %p153
    $region14: #{nmse_loss.1} parent=5 // pred_check_branch
      %156 = sbr.rel (%p154) target = $region16
    $region15: #{nmse_loss.1} parent=5 // pred_region
      // Predicated region
      $region17: #{nmse_loss.1} parent=15 // pred_check
        %p157 = pneg %p48
      $region18: #{nmse_loss.1} parent=15 // pred_check_branch
        %159 = sbr.rel (%p157) target = $region20
      $region19: #{nmse_loss.1} parent=15 // pred_region
        %s160 = sadd.s32 %s17, %s18
        %p161 = scmp.lt.s32.totalorder %s160, 0
        %s162 = scalar_select %p161, %s160, 0
        %s163 = smul.u32 4, %s162
        %s164 = ssub.s32 2, %s163
        %s165 = smul.u32 8, %s164
        %p166 = scmp.lt.s32.totalorder %s163, 1
        %s167 = scalar_select %p166, %s163, 1
        %s168 = smul.addr %s167, 8
        %s169 = scalar_lea.vmem %s0, %s168
        %s170 = sadd.s32 %s17, %s18
        %p171 = scmp.lt.s32.totalorder %s170, 0
        %s172 = scalar_select %p171, %s170, 0
        %s173 = smul.u32 4, %s172
        %s174 = ssub.s32 2, %s173
        %s175 = smul.u32 8, %s174
      $region20: #{nmse_loss.1} parent=15 // pred_fallthru
        _
      // Predicated region
      $region21: #{nmse_loss.1} parent=15 // pred_check
        %p176 = pneg %p80
      $region22: #{nmse_loss.1} parent=15 // pred_check_branch
        %178 = sbr.rel (%p176) target = $region24
      $region23: #{nmse_loss.1} parent=15 // pred_region
        %s179 = sadd.s32 %s17, %s18
        %p180 = scmp.lt.s32.totalorder %s179, 0
        %s181 = scalar_select %p180, %s179, 0
        %s182 = smul.u32 4, %s181
        %s183 = ssub.s32 2, %s182
        %s184 = smul.u32 8, %s183
        %p185 = scmp.lt.s32.totalorder %s182, 1
        %s186 = scalar_select %p185, %s182, 1
        %s187 = smul.addr %s186, 8
        %s188 = scalar_lea.vmem %s1, %s187
        %s189 = sadd.s32 %s17, %s18
        %p190 = scmp.lt.s32.totalorder %s189, 0
        %s191 = scalar_select %p190, %s189, 0
        %s192 = smul.u32 4, %s191
        %s193 = ssub.s32 2, %s192
        %s194 = smul.u32 8, %s193
      $region24: #{nmse_loss.1} parent=15 // pred_fallthru
        _
    $region16: #{nmse_loss.1} parent=5 // pred_fallthru
      _
    %p195 = scmp.le.s32.totalorder 1, %s10
    %p196 = scmp.lt.s32.totalorder %s10, 3
    %p197 = pnand %p195, %p196
    %p198 = pneg %p197
    // Predicated region
    $region25: #{nmse_loss.1} parent=5 // pred_check
      _
    $region26: #{nmse_loss.1} parent=5 // pred_check_branch
      %200 = sbr.rel (%p197) target = $region28
    $region27: #{nmse_loss.1} parent=5 // pred_region
      %s201 = ssub.s32 %s10, 1
      %s202 = sadd.s32 %s19, %s20
      %p203 = scmp.lt.s32.totalorder %s202, 0
      %s204 = scalar_select %p203, %s202, 0
      %s205 = smul.u32 4, %s204
      %s206 = ssub.s32 2, %s205
      %s207 = smul.u32 8, %s206
      %p208 = scmp.lt.s32.totalorder %s205, 1
      %s209 = scalar_select %p208, %s205, 1
      %s210 = smul.addr %s209, 8
      %s211 = scalar_lea.vmem %s0, %s210
      %p212 = pneg %p54
      %p213 = pneg %p51
      %s214 = sadd.s32 %s19, %s20
      %p215 = scmp.lt.s32.totalorder %s214, 0
      %s216 = scalar_select %p215, %s214, 0
      %s217 = smul.u32 4, %s216
      %s218 = ssub.s32 2, %s217
      %s219 = smul.u32 8, %s218
      %p220 = scmp.lt.s32.totalorder %s217, 1
      %s221 = scalar_select %p220, %s217, 1
      %s222 = smul.addr %s221, 8
      %s223 = scalar_lea.vmem %s1, %s222
      %p224 = pneg %p86
      %p225 = pneg %p83
      %p226 = pneg %p112
      %p227 = pneg %p109
      %p228 = scmp.lt.s32.totalorder %s19, 1
      %s229 = scalar_select %p228, %s19, 1
      %s230 = smul.addr %s229, 8
      %s231 = scalar_lea.vmem %s2, %s230
      %p232 = pneg %p138
      %p233 = pneg %p135
      %p234 = scmp.lt.s32.totalorder %s19, 1
      %s235 = scalar_select %p234, %s19, 1
      %s236 = smul.addr %s235, 8
      %s237 = scalar_lea.vmem %s3, %s236
      %s238 = sadd.s32 %s19, %s20
      %p239 = scmp.lt.s32.totalorder %s238, 0
      %s240 = scalar_select %p239, %s238, 0
      %s241 = smul.u32 4, %s240
      %s242 = ssub.s32 2, %s241
      %s243 = smul.u32 8, %s242
      %p244 = scmp.lt.s32.totalorder %s241, 1
      %s245 = scalar_select %p244, %s241, 1
      %s246 = smul.addr %s245, 8
      %s247 = scalar_lea.vmem %s0, %s246
      %s248 = sadd.s32 %s19, %s20
      %p249 = scmp.lt.s32.totalorder %s248, 0
      %s250 = scalar_select %p249, %s248, 0
      %s251 = smul.u32 4, %s250
      %s252 = ssub.s32 2, %s251
      %s253 = smul.u32 8, %s252
      %s254 = sadd.s32 %s19, %s20
      %p255 = scmp.lt.s32.totalorder %s254, 0
      %s256 = scalar_select %p255, %s254, 0
      %s257 = smul.u32 4, %s256
      %s258 = ssub.s32 2, %s257
      %s259 = smul.u32 8, %s258
      %p260 = scmp.lt.s32.totalorder %s257, 1
      %s261 = scalar_select %p260, %s257, 1
      %s262 = smul.addr %s261, 8
      %s263 = scalar_lea.vmem %s1, %s262
      %s264 = sadd.s32 %s19, %s20
      %p265 = scmp.lt.s32.totalorder %s264, 0
      %s266 = scalar_select %p265, %s264, 0
      %s267 = smul.u32 4, %s266
      %s268 = ssub.s32 2, %s267
      %s269 = smul.u32 8, %s268
      %p270 = scmp.lt.s32.totalorder %s19, 1
      %s271 = scalar_select %p270, %s19, 1
      %s272 = smul.addr %s271, 8
      %s273 = scalar_lea.vmem %s2, %s272
      %p274 = scmp.lt.s32.totalorder %s19, 1
      %s275 = scalar_select %p274, %s19, 1
      %s276 = smul.addr %s275, 8
      %s277 = scalar_lea.vmem %s3, %s276
      %p278 = scmp.eq.s32.totalorder %s20, 0
      // Predicated region
      $region29: #{nmse_loss.1} parent=27 // pred_check
        %p279 = pneg %p278
      $region30: #{nmse_loss.1} parent=27 // pred_check_branch
        %281 = sbr.rel (%p279) target = $region32
      $region31: #{nmse_loss.1} parent=27 // pred_region
        %282 = vst [vmem:[#allocation2] sm:$0xff] 0.0
        %283 = vst [vmem:[#allocation2 + $0x8] sm:$0xff] 0.0
        %284 = vst [vmem:[#allocation2 + $0x10] sm:$0xff] 0.0
        %285 = vst [vmem:[#allocation2 + $0x18] sm:$0xff] 0.0
        %286 = vst [vmem:[#allocation3] sm:$0xff] 0.0
        %287 = vst [vmem:[#allocation3 + $0x8] sm:$0xff] 0.0
        %288 = vst [vmem:[#allocation3 + $0x10] sm:$0xff] 0.0
        %289 = vst [vmem:[#allocation3 + $0x18] sm:$0xff] 0.0
      $region32: #{nmse_loss.1} parent=27 // pred_fallthru
        _
      %v290 = vld [vmem:[%s247] sm:$0xff]
      %v291 = vld [vmem:[%s247 + $0x8] sm:$0xff]
      %v292 = vld [vmem:[%s247 + $0x10] sm:$0xff]
      %v293 = vld [vmem:[%s247 + $0x18] sm:$0xff]
      %v294 = vld [vmem:[%s263] sm:$0xff]
      %v295 = vld [vmem:[%s263 + $0x8] sm:$0xff]
      %v296 = vld [vmem:[%s263 + $0x10] sm:$0xff]
      %v297 = vld [vmem:[%s263 + $0x18] sm:$0xff]
      %s298 = sadd.s32 %s19, %s20
      %s299 = smul.u32 %s298, 32
      %v300 = vlaneseq
      %v301 = vshrl.u32 %v300, 7
      %v302 = vadd.s32 %v301, 8
      %v303 = vadd.s32 %v301, 16
      %v304 = vadd.s32 %v301, 24
      %v305 = vstv %s299
      %v306 = vadd.s32 %v305, %v301
      %v307 = vadd.s32 %v305, %v302
      %v308 = vadd.s32 %v305, %v303
      %v309 = vadd.s32 %v305, %v304
      %vm310 = vcmp.lt.s32.totalorder %v306, 16
      %vm311 = vcmp.lt.s32.totalorder %v307, 16
      %vm312 = vcmp.lt.s32.totalorder %v308, 16
      %vm313 = vcmp.lt.s32.totalorder %v309, 16
      %v314 = vsel %vm310, %v294, 0.0
      %v315 = vsel %vm311, %v295, 0.0
      %v316 = vsel %vm312, %v296, 0.0
      %v317 = vsel %vm313, %v297, 0.0
      %v318 = vsub.f32 %v290, %v314
      %v319 = vsub.f32 %v291, %v315
      %v320 = vsub.f32 %v292, %v316
      %v321 = vsub.f32 %v293, %v317
      %v322 = vsel %vm310, %v318, 0.0
      %v323 = vsel %vm311, %v319, 0.0
      %v324 = vsel %vm312, %v320, 0.0
      %v325 = vsel %vm313, %v321, 0.0
      %v326 = vld [vmem:[#allocation2] sm:$0xff]
      %v327 = vld [vmem:[#allocation2 + $0x8] sm:$0xff]
      %v328 = vld [vmem:[#allocation2 + $0x10] sm:$0xff]
      %v329 = vld [vmem:[#allocation2 + $0x18] sm:$0xff]
      %v330 = vmul.f32 %v322, %v322
      %v331 = vmul.f32 %v323, %v323
      %v332 = vmul.f32 %v324, %v324
      %v333 = vmul.f32 %v325, %v325
      %v334 = vadd.f32 %v326, %v330
      %v335 = vadd.f32 %v327, %v331
      %v336 = vadd.f32 %v328, %v332
      %v337 = vadd.f32 %v329, %v333
      %338 = vst [vmem:[#allocation2] sm:$0xff] %v334
      %339 = vst [vmem:[#allocation2 + $0x8] sm:$0xff] %v335
      %340 = vst [vmem:[#allocation2 + $0x10] sm:$0xff] %v336
      %341 = vst [vmem:[#allocation2 + $0x18] sm:$0xff] %v337
      %v342 = vld [vmem:[#allocation3] sm:$0xff]
      %v343 = vld [vmem:[#allocation3 + $0x8] sm:$0xff]
      %v344 = vld [vmem:[#allocation3 + $0x10] sm:$0xff]
      %v345 = vld [vmem:[#allocation3 + $0x18] sm:$0xff]
      %v346 = vmul.f32 %v314, %v314
      %v347 = vmul.f32 %v315, %v315
      %v348 = vmul.f32 %v316, %v316
      %v349 = vmul.f32 %v317, %v317
      %v350 = vadd.f32 %v342, %v346
      %v351 = vadd.f32 %v343, %v347
      %v352 = vadd.f32 %v344, %v348
      %v353 = vadd.f32 %v345, %v349
      %354 = vst [vmem:[#allocation3] sm:$0xff] %v350
      %355 = vst [vmem:[#allocation3 + $0x8] sm:$0xff] %v351
      %356 = vst [vmem:[#allocation3 + $0x10] sm:$0xff] %v352
      %357 = vst [vmem:[#allocation3 + $0x18] sm:$0xff] %v353
      // Predicated region
      $region33: #{nmse_loss.1} parent=27 // pred_check
        %p358 = pneg %p278
      $region34: #{nmse_loss.1} parent=27 // pred_check_branch
        %360 = sbr.rel (%p358) target = $region36
      $region35: #{nmse_loss.1} parent=27 // pred_region
        %v361 = vld [vmem:[#allocation2] sm:$0xff]
        %v362 = vld [vmem:[#allocation2 + $0x8] sm:$0xff]
        %v363 = vld [vmem:[#allocation2 + $0x10] sm:$0xff]
        %v364 = vld [vmem:[#allocation2 + $0x18] sm:$0xff]
        %v365 = vadd.f32 %v361, %v362
        %v366 = vadd.f32 %v365, %v363
        %v367 = vadd.f32 %v366, %v364
        %368 = vst [vmem:[%s273] sm:$0xff] %v367
        %v369 = vld [vmem:[#allocation3] sm:$0xff]
        %v370 = vld [vmem:[#allocation3 + $0x8] sm:$0xff]
        %v371 = vld [vmem:[#allocation3 + $0x10] sm:$0xff]
        %v372 = vld [vmem:[#allocation3 + $0x18] sm:$0xff]
        %v373 = vadd.f32 %v369, %v370
        %v374 = vadd.f32 %v373, %v371
        %v375 = vadd.f32 %v374, %v372
        %376 = vst [vmem:[%s277] sm:$0xff] %v375
      $region36: #{nmse_loss.1} parent=27 // pred_fallthru
        _
      %p377 = scmp.lt.s32.totalorder %s19, 1
      %s378 = scalar_select %p377, %s19, 1
      %s379 = smul.addr %s378, 8
      %s380 = scalar_lea.vmem %s2, %s379
      %p381 = scmp.lt.s32.totalorder %s19, 1
      %s382 = scalar_select %p381, %s19, 1
      %s383 = smul.addr %s382, 8
      %s384 = scalar_lea.vmem %s3, %s383
      // Predicated region
      $region37: #{nmse_loss.1} parent=27 // pred_check
        %p385 = pneg %p109
      $region38: #{nmse_loss.1} parent=27 // pred_check_branch
        %387 = sbr.rel (%p385) target = $region40
      $region39: #{nmse_loss.1} parent=27 // pred_region
        _
      $region40: #{nmse_loss.1} parent=27 // pred_fallthru
        _
      // Predicated region
      $region41: #{nmse_loss.1} parent=27 // pred_check
        %p388 = pneg %p135
      $region42: #{nmse_loss.1} parent=27 // pred_check_branch
        %390 = sbr.rel (%p388) target = $region44
      $region43: #{nmse_loss.1} parent=27 // pred_region
        _
      $region44: #{nmse_loss.1} parent=27 // pred_fallthru
        _
    $region28: #{nmse_loss.1} parent=5 // pred_fallthru
      _
    %p391 = scmp.le.s32.totalorder 2, %s10
    // Predicated region
    $region45: #{nmse_loss.1} parent=5 // pred_check
      %p392 = pneg %p391
    $region46: #{nmse_loss.1} parent=5 // pred_check_branch
      %394 = sbr.rel (%p392) target = $region48
    $region47: #{nmse_loss.1} parent=5 // pred_region
      %s395 = ssub.s32 %s10, 2
      // Predicated region
      $region49: #{nmse_loss.1} parent=47 // pred_check
        %p396 = pneg %p115
      $region50: #{nmse_loss.1} parent=47 // pred_check_branch
        %398 = sbr.rel (%p396) target = $region52
      $region51: #{nmse_loss.1} parent=47 // pred_region
        %p399 = scmp.lt.s32.totalorder %s21, 1
        %s400 = scalar_select %p399, %s21, 1
        %s401 = smul.addr %s400, 8
        %s402 = scalar_lea.vmem %s2, %s401
      $region52: #{nmse_loss.1} parent=47 // pred_fallthru
        _
      // Predicated region
      $region53: #{nmse_loss.1} parent=47 // pred_check
        %p403 = pneg %p141
      $region54: #{nmse_loss.1} parent=47 // pred_check_branch
        %405 = sbr.rel (%p403) target = $region56
      $region55: #{nmse_loss.1} parent=47 // pred_region
        %p406 = scmp.lt.s32.totalorder %s21, 1
        %s407 = scalar_select %p406, %s21, 1
        %s408 = smul.addr %s407, 8
        %s409 = scalar_lea.vmem %s3, %s408
      $region56: #{nmse_loss.1} parent=47 // pred_fallthru
        _
    $region48: #{nmse_loss.1} parent=5 // pred_fallthru
      _
  $region6: #{nmse_loss.1} parent=0 // loop_footer
    %s14 = sadd.s32 1, %s10
  $region7: #{nmse_loss.1} parent=0 // loop_footer_branch
    %9 = sbr.rel target = $region3
  $region8: #{nmse_loss.1} parent=0 // loop_exit
    _

</llo_original>
